<compile_context>
chip_gen: v7x
topology: tpu7x:2x2x1
jax: 0.10.0
libtpu: 0.0.40
codegen_flags: <defaults>
</compile_context>

<pallas_src>
import functools
import random

import jax
import jax.numpy as jnp
from jax.experimental import pallas as pl
from jax.experimental.pallas import tpu as pltpu


# ----------------------------------------------------------------------------
# Device-aware streaming block size
# ----------------------------------------------------------------------------
def _device_block_bytes():
    try:
        kind = jax.devices()[0].device_kind.lower()
    except Exception:
        kind = ""
    if "v7" in kind:
        return 8 * 1024 * 1024   # 3.2 TB/s/TC: big blocks keep step overhead <10%
    if "v6" in kind:
        return 4 * 1024 * 1024   # ~86% of roofline already at 4 MiB
    return 2 * 1024 * 1024       # v5e/v5p/v4/unknown: conservative, near-roofline


_BLOCK_BYTES = _device_block_bytes()
# 2x double-buffered (in + out) blocks plus internal-scratch headroom.
_VMEM_LIMIT_BYTES = 4 * _BLOCK_BYTES + (8 << 20)

# Below this size a fused XLA elementwise already hits the HBM roofline and a
# pallas_call launch (+ ~0.35 us/grid step) would be essentially 100% overhead.
_PALLAS_MIN_BYTES = 1 * 1024 * 1024

_WIDTH_CANDIDATES = (4096, 2048, 1024, 512, 256, 128)


# ----------------------------------------------------------------------------
# Kernel: pure HBM-streaming elementwise invert in the input's native dtype.
# ----------------------------------------------------------------------------
def _invert_kernel(x_ref, o_ref):
    o_ref[...] = jnp.array(1, dtype=x_ref.dtype) - x_ref[...]


def _invert_2d(x2d, r_tile, alias_input):
    rows, cols = x2d.shape
    kwargs = {}
    if alias_input:
        # Reuse the input HBM buffer for the output (only pays off when the
        # surrounding jit donates the argument; see invert_augmentation_).
        kwargs["input_output_aliases"] = {0: 0}
    return pl.pallas_call(
        _invert_kernel,
        out_shape=jax.ShapeDtypeStruct((rows, cols), x2d.dtype),
        grid=(pl.cdiv(rows, r_tile),),
        in_specs=[pl.BlockSpec((r_tile, cols), lambda i: (i, 0))],
        out_specs=pl.BlockSpec((r_tile, cols), lambda i: (i, 0)),
        compiler_params=pltpu.CompilerParams(
            dimension_semantics=("parallel",),
            vmem_limit_bytes=_VMEM_LIMIT_BYTES,
        ),
        **kwargs,
    )(x2d)


def _choose_layout(n, itemsize):
    """Pick (cols, rows, r_tile) for a lane-dense 2-D view of n elements.

    Returns None when n is not a multiple of 128 (caller uses the XLA path,
    no padding / extra HBM passes).
    """
    cols = None
    for cand in _WIDTH_CANDIDATES:            # widest lane dim that divides n
        if n % cand == 0 and n // cand >= 16:
            cols = cand
            break
    if cols is None:
        for cand in _WIDTH_CANDIDATES:
            if n % cand == 0:
                cols = cand
                break
    if cols is None:
        return None
    rows = n // cols
    target_rows = max(8, _BLOCK_BYTES // (cols * itemsize))
    if rows <= target_rows:
        r_tile = rows                          # full extent: always legal
    else:
        # multiple of 32 satisfies f32 (8,), bf16 (16,), int8/fp8 (32,) tiling
        r_tile = max(32, (target_rows // 32) * 32)
    # v7x has two TensorCores: make sure the "parallel" grid axis has at least
    # 2 steps whenever the row count allows it (1-TC chips are unaffected).
    if pl.cdiv(rows, r_tile) < 2 and rows >= 64:
        r_tile = max(32, (((rows + 1) // 2) // 32) * 32)
    return cols, rows, r_tile


def _invert_impl(x, *, alias_input=False):
    orig_shape = x.shape
    n = int(x.size)
    if n == 0:
        return x
    dtype = x.dtype
    itemsize = jnp.dtype(dtype).itemsize
    layout = _choose_layout(n, itemsize) if n * itemsize >= _PALLAS_MIN_BYTES else None
    if layout is None:
        # Small or ragged element count: fused XLA elementwise is already at
        # the HBM roofline; no pallas dispatch, no padding, 1 read + 1 write.
        # NOTE: native-dtype `1 - x` wraps for unsigned ints (matches torch).
        return jnp.array(1, dtype=dtype) - x
    cols, rows, r_tile = layout
    out2d = _invert_2d(x.reshape(rows, cols), r_tile, alias_input)
    return out2d.reshape(orig_shape)


# Default flavour: returns a fresh array (same semantics as `1 - x` in torch).
invert_augmentation = jax.jit(functools.partial(_invert_impl, alias_input=False))

# In-place flavour: donates the input HBM buffer and aliases the Pallas output
# onto it. The caller must not use the original array afterwards.
invert_augmentation_ = jax.jit(
    functools.partial(_invert_impl, alias_input=True), donate_argnums=0
)


def invert_layer(patch_feature_dict, Y, is_train=False, *, prob=0.3,
                 decisions=None, donate=False):
    """JAX/Pallas equivalent of InvertLayer.forward.

    patch_feature_dict: dict[str, array] of patch features (NCHW).
    Y: label tensor (passed through unchanged, as in the reference).
    prob: inversion probability per feature.
    decisions: optional dict[str, bool] overriding the random draws
               (for deterministic replay / testing).
    donate: if True, the input feature buffers of inverted features are
            donated and reused for the outputs.
    """
    if not is_train:
        return patch_feature_dict, Y

    aug_fn = invert_augmentation_ if donate else invert_augmentation
    aug_patches = {}
    for name, feat in patch_feature_dict.items():
        if decisions is not None:
            do_invert = bool(decisions[name])
        else:
            # Host-side Bernoulli(prob), exactly like the reference's
            # `random.random() <= self.prob` — no device->host sync.
            do_invert = random.random() <= prob
        if do_invert:
            aug_patches[name] = aug_fn(feat)
        else:
            # Kernel (and all HBM traffic) skipped entirely.
            aug_patches[name] = feat
    return aug_patches, Y


if __name__ == "__main__":
    key = jax.random.PRNGKey(0)
    k_x1, k_x2, k_big, k_y = jax.random.split(key, 4)

    # Small NCHW patch features, values in [0, 1] ("input is normalized").
    x1 = jax.random.uniform(k_x1, (2, 4, 16, 16), dtype=jnp.float32)
    x2 = jax.random.uniform(k_x2, (2, 4, 16, 16), dtype=jnp.float32)
    Y = jax.random.randint(k_y, (2,), 0, 10)
    patch_feature_dict = {"feat_a": x1, "feat_b": x2}

    # 1) Pallas streaming path: a feature large enough (2 MiB) to take the
    #    lane-dense kernel.
    x_big = jax.random.uniform(k_big, (2, 4, 256, 256), dtype=jnp.float32)
    inv_big = invert_augmentation(x_big)
    jax.block_until_ready(inv_big)
    assert jnp.allclose(inv_big, 1.0 - x_big, atol=1e-6)

    # Donating / aliased flavour (output reuses the input HBM buffer).
    ref_big = 1.0 - x_big            # reference computed before donation
    x_big_copy = x_big + 0.0         # throwaway buffer to donate
    inv_big2 = invert_augmentation_(x_big_copy)
    jax.block_until_ready(inv_big2)
    assert jnp.allclose(inv_big2, ref_big, atol=1e-6)

    # 2) Full layer, train path (small features -> fused XLA path).
    random.seed(0)
    aug_patches, Y_out = invert_layer(patch_feature_dict, Y, is_train=True, prob=0.3)
    jax.tree_util.tree_map(jax.block_until_ready, aug_patches)
    jax.block_until_ready(Y_out)

    random.seed(0)  # replay the same host-side Bernoulli draws for the reference
    for name, feat in patch_feature_dict.items():
        ref = 1.0 - feat if random.random() <= 0.3 else feat
        assert jnp.allclose(aug_patches[name], ref, atol=1e-6), name
    assert jnp.array_equal(Y_out, Y)

    # 3) Ragged element count -> XLA path (no padding, no extra HBM passes).
    x_odd = jax.random.uniform(k_x2, (3, 5, 7), dtype=jnp.float32)
    inv_odd = invert_augmentation(x_odd)
    jax.block_until_ready(inv_odd)
    assert jnp.allclose(inv_odd, 1.0 - x_odd, atol=1e-6)

    # 4) Eval path (pass-through).
    eval_patches, Y_eval = invert_layer(patch_feature_dict, Y, is_train=False)
    assert eval_patches is patch_feature_dict
    assert Y_eval is Y

    print("KERNEL_OK")
</pallas_src>

<mosaic_0001>
module attributes {stable_mosaic.version = 11 : i64} {
  func.func @_invert_kernel(%arg0: i32, %arg1: memref<64x4096xf32, #tpu.memory_space<vmem>>, %arg2: memref<64x4096xf32, #tpu.memory_space<vmem>>) attributes {dimension_semantics = [#tpu.dimension_semantics<parallel>], iteration_bounds = array<i64: 2>, scalar_prefetch = 0 : i64, scratch_operands = 0 : i64, tpu.core_type = #tpu.core_type<tc>, window_params = [{transform_indices = @transform_0, window_bounds = array<i64: 64, 4096>}, {transform_indices = @transform_1, window_bounds = array<i64: 64, 4096>}]} {
    %c0 = arith.constant 0 : index
    %c0_0 = arith.constant 0 : index
    %0 = vector.load %arg1[%c0, %c0_0] : memref<64x4096xf32, #tpu.memory_space<vmem>>, vector<64x4096xf32>
    %cst = arith.constant 1.000000e+00 : f32
    %1 = vector.broadcast %cst : f32 to vector<64x4096xf32>
    %2 = arith.subf %1, %0 : vector<64x4096xf32>
    %c0_1 = arith.constant 0 : index
    %c0_2 = arith.constant 0 : index
    %3 = vector.load %arg2[%c0_1, %c0_2] : memref<64x4096xf32, #tpu.memory_space<vmem>>, vector<64x4096xf32>
    tpu.vector_store %arg2[%c0_1, %c0_2], %2 {strides = array<i32>} : memref<64x4096xf32, #tpu.memory_space<vmem>>, vector<64x4096xf32>,
    return
  }
  func.func @transform_0(%arg0: i32) -> (i32, i32) {
    %c0_i32 = arith.constant 0 : i32
    %c0_i32_0 = arith.constant 0 : i32
    return %arg0, %c0_i32 : i32, i32
  }
  func.func @transform_1(%arg0: i32) -> (i32, i32) {
    %c0_i32 = arith.constant 0 : i32
    %c0_i32_0 = arith.constant 0 : i32
    return %arg0, %c0_i32 : i32, i32
  }
}

</mosaic_0001>

<llo_original>
// kernel: _invert_impl.1
$region0: #{_invert_impl.1}
  #allocation0 [shape = 'u32[]', space=smem, size = 0x4, offset = 0x4, fixed_abs, tag = 'smem constant byte address 0x4 - core index']
  #allocation1 [shape = 'u32[144,128]{1,0:T(1,128)}', space=vmem, size = 0x12000, scoped, tag = 'internal scratch']
  %s0 = inlined_call_operand.vmem [shape: f32[128,4096], index: 0, kind: input, shape index: {}]
  %s1 = inlined_call_operand.vmem [shape: f32[128,4096], index: 1, kind: output, shape index: {}]
  %s2 = sld [smem:[#allocation0]]
  $region37: #{_invert_impl.1} parent=0
    _
  %s4 = ssub.s32 1, %s2
  %s5 = scalar_select 0, %s4, %s2
  loop: start=0, step=1, limit=4
  $region2: #{_invert_impl.1} parent=0 // loop_pre_header
    _
  $region3: #{_invert_impl.1} parent=0 // loop_header
    %s7 = sphi 0, %s11
    %p8 = scmp.ge.s32.totalorder %s7, 4
    %s17 = sphi 0, %s19
    %s20 = sphi 0, %s17
    %s21 = sphi 0, %s20
    %s37 = sphi 0, %s21
    %s43 = sphi 0, %s45
    %s46 = sphi 0, %s43
    %s47 = sphi 0, %s46
    %s63 = sphi 0, %s47
  $region4: #{_invert_impl.1} parent=0 // loop_header_branch
    %10 = sbr.rel (%p8) target = $region8
  $region5: #{_invert_impl.1} parent=0 // loop_body
    %s12 = ssub.s32 %s7, 1
    %s13 = ssub.s32 %s7, 2
    %s14 = sadd.s32 %s7, 1
    %s15 = ssub.s32 %s7, %s14
    %p16 = scmp.eq.s32.totalorder %s15, 0
    %s18 = sadd.s32 %s17, 1
    %s19 = scalar_select %p16, %s17, %s18
    %p22 = pneg %p16
    %p23 = scmp.eq.s32.totalorder %s7, 1
    %p24 = por %p22, %p23
    %p25 = scmp.ne.s32.totalorder %s17, %s20
    %p26 = scmp.eq.s32.totalorder %s7, 0
    %p27 = por %p25, %p26
    %p28 = scmp.ne.s32.totalorder %s17, %s20
    %p29 = scmp.eq.s32.totalorder %s12, 1
    %p30 = por %p28, %p29
    %p31 = scmp.ne.s32.totalorder %s20, %s21
    %p32 = scmp.eq.s32.totalorder %s12, 0
    %p33 = por %p31, %p32
    %p34 = scmp.ne.s32.totalorder %s20, %s21
    %p35 = scmp.eq.s32.totalorder %s13, 1
    %p36 = por %p34, %p35
    %p38 = scmp.ne.s32.totalorder %s21, %s37
    %p39 = scmp.eq.s32.totalorder %s13, 0
    %p40 = por %p38, %p39
    %s41 = ssub.s32 %s7, %s14
    %p42 = scmp.eq.s32.totalorder %s41, 0
    %s44 = sadd.s32 %s43, 1
    %s45 = scalar_select %p42, %s43, %s44
    %p48 = pneg %p42
    %p49 = scmp.eq.s32.totalorder %s7, 1
    %p50 = por %p48, %p49
    %p51 = scmp.ne.s32.totalorder %s43, %s46
    %p52 = scmp.eq.s32.totalorder %s7, 0
    %p53 = por %p51, %p52
    %p54 = scmp.ne.s32.totalorder %s43, %s46
    %p55 = scmp.eq.s32.totalorder %s12, 1
    %p56 = por %p54, %p55
    %p57 = scmp.ne.s32.totalorder %s46, %s47
    %p58 = scmp.eq.s32.totalorder %s12, 0
    %p59 = por %p57, %p58
    %p60 = scmp.ne.s32.totalorder %s46, %s47
    %p61 = scmp.eq.s32.totalorder %s13, 1
    %p62 = por %p60, %p61
    %p64 = scmp.ne.s32.totalorder %s47, %s63
    %p65 = scmp.eq.s32.totalorder %s13, 0
    %p66 = por %p64, %p65
    %p67 = scmp.le.s32.totalorder 1, %s7
    %p68 = scmp.lt.s32.totalorder %s7, 3
    %p69 = pnand %p67, %p68
    %p70 = pneg %p69
    // Predicated region
    $region9: #{_invert_impl.1} parent=5 // pred_check
      _
    $region10: #{_invert_impl.1} parent=5 // pred_check_branch
      %72 = sbr.rel (%p69) target = $region12
    $region11: #{_invert_impl.1} parent=5 // pred_region
      %s73 = ssub.s32 %s7, 1
    $region12: #{_invert_impl.1} parent=5 // pred_fallthru
      _
    %p74 = scmp.lt.s32.totalorder %s7, 2
    // Predicated region
    $region13: #{_invert_impl.1} parent=5 // pred_check
      %p75 = pneg %p74
    $region14: #{_invert_impl.1} parent=5 // pred_check_branch
      %77 = sbr.rel (%p75) target = $region16
    $region15: #{_invert_impl.1} parent=5 // pred_region
      // Predicated region
      $region17: #{_invert_impl.1} parent=15 // pred_check
        %p78 = pneg %p27
      $region18: #{_invert_impl.1} parent=15 // pred_check_branch
        %80 = sbr.rel (%p78) target = $region20
      $region19: #{_invert_impl.1} parent=15 // pred_region
        %s81 = smul.u32 8, %s7
        %p82 = scmp.lt.s32.totalorder %s81, 15
        %s83 = scalar_select %p82, %s81, 15
        %s84 = smul.addr %s83, 32
        %s85 = smul.addr %s84, 8
        %s86 = scalar_lea.vmem %s0, %s85
        %s87 = smul.u32 8, %s7
      $region20: #{_invert_impl.1} parent=15 // pred_fallthru
        _
    $region16: #{_invert_impl.1} parent=5 // pred_fallthru
      _
    %p88 = scmp.le.s32.totalorder 1, %s7
    %p89 = scmp.lt.s32.totalorder %s7, 3
    %p90 = pnand %p88, %p89
    %p91 = pneg %p90
    // Predicated region
    $region21: #{_invert_impl.1} parent=5 // pred_check
      _
    $region22: #{_invert_impl.1} parent=5 // pred_check_branch
      %93 = sbr.rel (%p90) target = $region24
    $region23: #{_invert_impl.1} parent=5 // pred_region
      %s94 = ssub.s32 %s7, 1
      %s95 = smul.u32 8, %s12
      %p96 = scmp.lt.s32.totalorder %s95, 15
      %s97 = scalar_select %p96, %s95, 15
      %s98 = smul.addr %s97, 32
      %s99 = smul.addr %s98, 8
      %s100 = scalar_lea.vmem %s0, %s99
      %p101 = pneg %p33
      %p102 = pneg %p30
      %p103 = pneg %p59
      %p104 = pneg %p56
      %s105 = smul.u32 8, %s12
      %p106 = scmp.lt.s32.totalorder %s105, 15
      %s107 = scalar_select %p106, %s105, 15
      %s108 = smul.addr %s107, 32
      %s109 = smul.addr %s108, 8
      %s110 = scalar_lea.vmem %s1, %s109
      %s111 = smul.u32 8, %s12
      %p112 = scmp.lt.s32.totalorder %s111, 15
      %s113 = scalar_select %p112, %s111, 15
      %s114 = smul.addr %s113, 32
      %s115 = smul.addr %s114, 8
      %s116 = scalar_lea.vmem %s0, %s115
      %s117 = smul.u32 8, %s12
      %s118 = smul.u32 8, %s12
      %p119 = scmp.lt.s32.totalorder %s118, 15
      %s120 = scalar_select %p119, %s118, 15
      %s121 = smul.addr %s120, 32
      %s122 = smul.addr %s121, 8
      %s123 = scalar_lea.vmem %s1, %s122
      %s124 = smul.u32 8, %s12
      %v125 = vld [vmem:[%s116] sm:$0xff]
      %v126 = vld [vmem:[%s116 + $0x8] sm:$0xff]
      %v127 = vld [vmem:[%s116 + $0x10] sm:$0xff]
      %v128 = vld [vmem:[%s116 + $0x18] sm:$0xff]
      %v129 = vld [vmem:[%s116 + $0x20] sm:$0xff]
      %v130 = vld [vmem:[%s116 + $0x28] sm:$0xff]
      %v131 = vld [vmem:[%s116 + $0x30] sm:$0xff]
      %v132 = vld [vmem:[%s116 + $0x38] sm:$0xff]
      %v133 = vld [vmem:[%s116 + $0x40] sm:$0xff]
      %v134 = vld [vmem:[%s116 + $0x48] sm:$0xff]
      %v135 = vld [vmem:[%s116 + $0x50] sm:$0xff]
      %v136 = vld [vmem:[%s116 + $0x58] sm:$0xff]
      %v137 = vld [vmem:[%s116 + $0x60] sm:$0xff]
      %v138 = vld [vmem:[%s116 + $0x68] sm:$0xff]
      %v139 = vld [vmem:[%s116 + $0x70] sm:$0xff]
      %v140 = vld [vmem:[%s116 + $0x78] sm:$0xff]
      %v141 = vld [vmem:[%s116 + $0x80] sm:$0xff]
      %v142 = vld [vmem:[%s116 + $0x88] sm:$0xff]
      %v143 = vld [vmem:[%s116 + $0x90] sm:$0xff]
      %v144 = vld [vmem:[%s116 + $0x98] sm:$0xff]
      %v145 = vld [vmem:[%s116 + $0xa0] sm:$0xff]
      %v146 = vld [vmem:[%s116 + $0xa8] sm:$0xff]
      %v147 = vld [vmem:[%s116 + $0xb0] sm:$0xff]
      %v148 = vld [vmem:[%s116 + $0xb8] sm:$0xff]
      %v149 = vld [vmem:[%s116 + $0xc0] sm:$0xff]
      %v150 = vld [vmem:[%s116 + $0xc8] sm:$0xff]
      %v151 = vld [vmem:[%s116 + $0xd0] sm:$0xff]
      %v152 = vld [vmem:[%s116 + $0xd8] sm:$0xff]
      %v153 = vld [vmem:[%s116 + $0xe0] sm:$0xff]
      %v154 = vld [vmem:[%s116 + $0xe8] sm:$0xff]
      %v155 = vld [vmem:[%s116 + $0xf0] sm:$0xff]
      %v156 = vld [vmem:[%s116 + $0xf8] sm:$0xff]
      %v157 = vld [vmem:[%s116 + $0x100] sm:$0xff]
      %v158 = vld [vmem:[%s116 + $0x108] sm:$0xff]
      %v159 = vld [vmem:[%s116 + $0x110] sm:$0xff]
      %v160 = vld [vmem:[%s116 + $0x118] sm:$0xff]
      %v161 = vld [vmem:[%s116 + $0x120] sm:$0xff]
      %v162 = vld [vmem:[%s116 + $0x128] sm:$0xff]
      %v163 = vld [vmem:[%s116 + $0x130] sm:$0xff]
      %v164 = vld [vmem:[%s116 + $0x138] sm:$0xff]
      %v165 = vld [vmem:[%s116 + $0x140] sm:$0xff]
      %v166 = vld [vmem:[%s116 + $0x148] sm:$0xff]
      %v167 = vld [vmem:[%s116 + $0x150] sm:$0xff]
      %v168 = vld [vmem:[%s116 + $0x158] sm:$0xff]
      %v169 = vld [vmem:[%s116 + $0x160] sm:$0xff]
      %v170 = vld [vmem:[%s116 + $0x168] sm:$0xff]
      %v171 = vld [vmem:[%s116 + $0x170] sm:$0xff]
      %v172 = vld [vmem:[%s116 + $0x178] sm:$0xff]
      %v173 = vld [vmem:[%s116 + $0x180] sm:$0xff]
      %v174 = vld [vmem:[%s116 + $0x188] sm:$0xff]
      %v175 = vld [vmem:[%s116 + $0x190] sm:$0xff]
      %v176 = vld [vmem:[%s116 + $0x198] sm:$0xff]
      %v177 = vld [vmem:[%s116 + $0x1a0] sm:$0xff]
      %v178 = vld [vmem:[%s116 + $0x1a8] sm:$0xff]
      %v179 = vld [vmem:[%s116 + $0x1b0] sm:$0xff]
      %v180 = vld [vmem:[%s116 + $0x1b8] sm:$0xff]
      %v181 = vld [vmem:[%s116 + $0x1c0] sm:$0xff]
      %v182 = vld [vmem:[%s116 + $0x1c8] sm:$0xff]
      %v183 = vld [vmem:[%s116 + $0x1d0] sm:$0xff]
      %v184 = vld [vmem:[%s116 + $0x1d8] sm:$0xff]
      %v185 = vld [vmem:[%s116 + $0x1e0] sm:$0xff]
      %v186 = vld [vmem:[%s116 + $0x1e8] sm:$0xff]
      %v187 = vld [vmem:[%s116 + $0x1f0] sm:$0xff]
      %v188 = vld [vmem:[%s116 + $0x1f8] sm:$0xff]
      %v189 = vld [vmem:[%s116 + $0x200] sm:$0xff]
      %v190 = vld [vmem:[%s116 + $0x208] sm:$0xff]
      %v191 = vld [vmem:[%s116 + $0x210] sm:$0xff]
      %v192 = vld [vmem:[%s116 + $0x218] sm:$0xff]
      %v193 = vld [vmem:[%s116 + $0x220] sm:$0xff]
      %v194 = vld [vmem:[%s116 + $0x228] sm:$0xff]
      %v195 = vld [vmem:[%s116 + $0x230] sm:$0xff]
      %v196 = vld [vmem:[%s116 + $0x238] sm:$0xff]
      %v197 = vld [vmem:[%s116 + $0x240] sm:$0xff]
      %v198 = vld [vmem:[%s116 + $0x248] sm:$0xff]
      %v199 = vld [vmem:[%s116 + $0x250] sm:$0xff]
      %v200 = vld [vmem:[%s116 + $0x258] sm:$0xff]
      %v201 = vld [vmem:[%s116 + $0x260] sm:$0xff]
      %v202 = vld [vmem:[%s116 + $0x268] sm:$0xff]
      %v203 = vld [vmem:[%s116 + $0x270] sm:$0xff]
      %v204 = vld [vmem:[%s116 + $0x278] sm:$0xff]
      %v205 = vld [vmem:[%s116 + $0x280] sm:$0xff]
      %v206 = vld [vmem:[%s116 + $0x288] sm:$0xff]
      %v207 = vld [vmem:[%s116 + $0x290] sm:$0xff]
      %v208 = vld [vmem:[%s116 + $0x298] sm:$0xff]
      %v209 = vld [vmem:[%s116 + $0x2a0] sm:$0xff]
      %v210 = vld [vmem:[%s116 + $0x2a8] sm:$0xff]
      %v211 = vld [vmem:[%s116 + $0x2b0] sm:$0xff]
      %v212 = vld [vmem:[%s116 + $0x2b8] sm:$0xff]
      %v213 = vld [vmem:[%s116 + $0x2c0] sm:$0xff]
      %v214 = vld [vmem:[%s116 + $0x2c8] sm:$0xff]
      %v215 = vld [vmem:[%s116 + $0x2d0] sm:$0xff]
      %v216 = vld [vmem:[%s116 + $0x2d8] sm:$0xff]
      %v217 = vld [vmem:[%s116 + $0x2e0] sm:$0xff]
      %v218 = vld [vmem:[%s116 + $0x2e8] sm:$0xff]
      %v219 = vld [vmem:[%s116 + $0x2f0] sm:$0xff]
      %v220 = vld [vmem:[%s116 + $0x2f8] sm:$0xff]
      %v221 = vld [vmem:[%s116 + $0x300] sm:$0xff]
      %v222 = vld [vmem:[%s116 + $0x308] sm:$0xff]
      %v223 = vld [vmem:[%s116 + $0x310] sm:$0xff]
      %v224 = vld [vmem:[%s116 + $0x318] sm:$0xff]
      %v225 = vld [vmem:[%s116 + $0x320] sm:$0xff]
      %v226 = vld [vmem:[%s116 + $0x328] sm:$0xff]
      %v227 = vld [vmem:[%s116 + $0x330] sm:$0xff]
      %v228 = vld [vmem:[%s116 + $0x338] sm:$0xff]
      %v229 = vld [vmem:[%s116 + $0x340] sm:$0xff]
      %v230 = vld [vmem:[%s116 + $0x348] sm:$0xff]
      %v231 = vld [vmem:[%s116 + $0x350] sm:$0xff]
      %v232 = vld [vmem:[%s116 + $0x358] sm:$0xff]
      %v233 = vld [vmem:[%s116 + $0x360] sm:$0xff]
      %v234 = vld [vmem:[%s116 + $0x368] sm:$0xff]
      %v235 = vld [vmem:[%s116 + $0x370] sm:$0xff]
      %v236 = vld [vmem:[%s116 + $0x378] sm:$0xff]
      %v237 = vld [vmem:[%s116 + $0x380] sm:$0xff]
      %v238 = vld [vmem:[%s116 + $0x388] sm:$0xff]
      %v239 = vld [vmem:[%s116 + $0x390] sm:$0xff]
      %v240 = vld [vmem:[%s116 + $0x398] sm:$0xff]
      %v241 = vld [vmem:[%s116 + $0x3a0] sm:$0xff]
      %v242 = vld [vmem:[%s116 + $0x3a8] sm:$0xff]
      %v243 = vld [vmem:[%s116 + $0x3b0] sm:$0xff]
      %v244 = vld [vmem:[%s116 + $0x3b8] sm:$0xff]
      %v245 = vld [vmem:[%s116 + $0x3c0] sm:$0xff]
      %v246 = vld [vmem:[%s116 + $0x3c8] sm:$0xff]
      %v247 = vld [vmem:[%s116 + $0x3d0] sm:$0xff]
      %v248 = vld [vmem:[%s116 + $0x3d8] sm:$0xff]
      %v249 = vld [vmem:[%s116 + $0x3e0] sm:$0xff]
      %v250 = vld [vmem:[%s116 + $0x3e8] sm:$0xff]
      %v251 = vld [vmem:[%s116 + $0x3f0] sm:$0xff]
      %v252 = vld [vmem:[%s116 + $0x3f8] sm:$0xff]
      %v253 = vld [vmem:[%s116 + $0x400] sm:$0xff]
      %v254 = vld [vmem:[%s116 + $0x408] sm:$0xff]
      %v255 = vld [vmem:[%s116 + $0x410] sm:$0xff]
      %v256 = vld [vmem:[%s116 + $0x418] sm:$0xff]
      %v257 = vld [vmem:[%s116 + $0x420] sm:$0xff]
      %v258 = vld [vmem:[%s116 + $0x428] sm:$0xff]
      %v259 = vld [vmem:[%s116 + $0x430] sm:$0xff]
      %v260 = vld [vmem:[%s116 + $0x438] sm:$0xff]
      %v261 = vld [vmem:[%s116 + $0x440] sm:$0xff]
      %v262 = vld [vmem:[%s116 + $0x448] sm:$0xff]
      %v263 = vld [vmem:[%s116 + $0x450] sm:$0xff]
      %v264 = vld [vmem:[%s116 + $0x458] sm:$0xff]
      %v265 = vld [vmem:[%s116 + $0x460] sm:$0xff]
      %v266 = vld [vmem:[%s116 + $0x468] sm:$0xff]
      %v267 = vld [vmem:[%s116 + $0x470] sm:$0xff]
      %v268 = vld [vmem:[%s116 + $0x478] sm:$0xff]
      %v269 = vld [vmem:[%s116 + $0x480] sm:$0xff]
      %v270 = vld [vmem:[%s116 + $0x488] sm:$0xff]
      %v271 = vld [vmem:[%s116 + $0x490] sm:$0xff]
      %v272 = vld [vmem:[%s116 + $0x498] sm:$0xff]
      %v273 = vld [vmem:[%s116 + $0x4a0] sm:$0xff]
      %v274 = vld [vmem:[%s116 + $0x4a8] sm:$0xff]
      %v275 = vld [vmem:[%s116 + $0x4b0] sm:$0xff]
      %v276 = vld [vmem:[%s116 + $0x4b8] sm:$0xff]
      %v277 = vld [vmem:[%s116 + $0x4c0] sm:$0xff]
      %v278 = vld [vmem:[%s116 + $0x4c8] sm:$0xff]
      %v279 = vld [vmem:[%s116 + $0x4d0] sm:$0xff]
      %v280 = vld [vmem:[%s116 + $0x4d8] sm:$0xff]
      %v281 = vld [vmem:[%s116 + $0x4e0] sm:$0xff]
      %v282 = vld [vmem:[%s116 + $0x4e8] sm:$0xff]
      %v283 = vld [vmem:[%s116 + $0x4f0] sm:$0xff]
      %v284 = vld [vmem:[%s116 + $0x4f8] sm:$0xff]
      %v285 = vld [vmem:[%s116 + $0x500] sm:$0xff]
      %v286 = vld [vmem:[%s116 + $0x508] sm:$0xff]
      %v287 = vld [vmem:[%s116 + $0x510] sm:$0xff]
      %v288 = vld [vmem:[%s116 + $0x518] sm:$0xff]
      %v289 = vld [vmem:[%s116 + $0x520] sm:$0xff]
      %v290 = vld [vmem:[%s116 + $0x528] sm:$0xff]
      %v291 = vld [vmem:[%s116 + $0x530] sm:$0xff]
      %v292 = vld [vmem:[%s116 + $0x538] sm:$0xff]
      %v293 = vld [vmem:[%s116 + $0x540] sm:$0xff]
      %v294 = vld [vmem:[%s116 + $0x548] sm:$0xff]
      %v295 = vld [vmem:[%s116 + $0x550] sm:$0xff]
      %v296 = vld [vmem:[%s116 + $0x558] sm:$0xff]
      %v297 = vld [vmem:[%s116 + $0x560] sm:$0xff]
      %v298 = vld [vmem:[%s116 + $0x568] sm:$0xff]
      %v299 = vld [vmem:[%s116 + $0x570] sm:$0xff]
      %v300 = vld [vmem:[%s116 + $0x578] sm:$0xff]
      %v301 = vld [vmem:[%s116 + $0x580] sm:$0xff]
      %v302 = vld [vmem:[%s116 + $0x588] sm:$0xff]
      %v303 = vld [vmem:[%s116 + $0x590] sm:$0xff]
      %v304 = vld [vmem:[%s116 + $0x598] sm:$0xff]
      %v305 = vld [vmem:[%s116 + $0x5a0] sm:$0xff]
      %v306 = vld [vmem:[%s116 + $0x5a8] sm:$0xff]
      %v307 = vld [vmem:[%s116 + $0x5b0] sm:$0xff]
      %v308 = vld [vmem:[%s116 + $0x5b8] sm:$0xff]
      %v309 = vld [vmem:[%s116 + $0x5c0] sm:$0xff]
      %v310 = vld [vmem:[%s116 + $0x5c8] sm:$0xff]
      %v311 = vld [vmem:[%s116 + $0x5d0] sm:$0xff]
      %v312 = vld [vmem:[%s116 + $0x5d8] sm:$0xff]
      %v313 = vld [vmem:[%s116 + $0x5e0] sm:$0xff]
      %v314 = vld [vmem:[%s116 + $0x5e8] sm:$0xff]
      %v315 = vld [vmem:[%s116 + $0x5f0] sm:$0xff]
      %v316 = vld [vmem:[%s116 + $0x5f8] sm:$0xff]
      %v317 = vld [vmem:[%s116 + $0x600] sm:$0xff]
      %v318 = vld [vmem:[%s116 + $0x608] sm:$0xff]
      %v319 = vld [vmem:[%s116 + $0x610] sm:$0xff]
      %v320 = vld [vmem:[%s116 + $0x618] sm:$0xff]
      %v321 = vld [vmem:[%s116 + $0x620] sm:$0xff]
      %v322 = vld [vmem:[%s116 + $0x628] sm:$0xff]
      %v323 = vld [vmem:[%s116 + $0x630] sm:$0xff]
      %v324 = vld [vmem:[%s116 + $0x638] sm:$0xff]
      %v325 = vld [vmem:[%s116 + $0x640] sm:$0xff]
      %v326 = vld [vmem:[%s116 + $0x648] sm:$0xff]
      %v327 = vld [vmem:[%s116 + $0x650] sm:$0xff]
      %v328 = vld [vmem:[%s116 + $0x658] sm:$0xff]
      %v329 = vld [vmem:[%s116 + $0x660] sm:$0xff]
      %v330 = vld [vmem:[%s116 + $0x668] sm:$0xff]
      %v331 = vld [vmem:[%s116 + $0x670] sm:$0xff]
      %v332 = vld [vmem:[%s116 + $0x678] sm:$0xff]
      %v333 = vld [vmem:[%s116 + $0x680] sm:$0xff]
      %v334 = vld [vmem:[%s116 + $0x688] sm:$0xff]
      %v335 = vld [vmem:[%s116 + $0x690] sm:$0xff]
      %v336 = vld [vmem:[%s116 + $0x698] sm:$0xff]
      %v337 = vld [vmem:[%s116 + $0x6a0] sm:$0xff]
      %v338 = vld [vmem:[%s116 + $0x6a8] sm:$0xff]
      %v339 = vld [vmem:[%s116 + $0x6b0] sm:$0xff]
      %v340 = vld [vmem:[%s116 + $0x6b8] sm:$0xff]
      %v341 = vld [vmem:[%s116 + $0x6c0] sm:$0xff]
      %v342 = vld [vmem:[%s116 + $0x6c8] sm:$0xff]
      %v343 = vld [vmem:[%s116 + $0x6d0] sm:$0xff]
      %v344 = vld [vmem:[%s116 + $0x6d8] sm:$0xff]
      %v345 = vld [vmem:[%s116 + $0x6e0] sm:$0xff]
      %v346 = vld [vmem:[%s116 + $0x6e8] sm:$0xff]
      %v347 = vld [vmem:[%s116 + $0x6f0] sm:$0xff]
      %v348 = vld [vmem:[%s116 + $0x6f8] sm:$0xff]
      %v349 = vld [vmem:[%s116 + $0x700] sm:$0xff]
      %v350 = vld [vmem:[%s116 + $0x708] sm:$0xff]
      %v351 = vld [vmem:[%s116 + $0x710] sm:$0xff]
      %v352 = vld [vmem:[%s116 + $0x718] sm:$0xff]
      %v353 = vld [vmem:[%s116 + $0x720] sm:$0xff]
      %v354 = vld [vmem:[%s116 + $0x728] sm:$0xff]
      %v355 = vld [vmem:[%s116 + $0x730] sm:$0xff]
      %v356 = vld [vmem:[%s116 + $0x738] sm:$0xff]
      %v357 = vld [vmem:[%s116 + $0x740] sm:$0xff]
      %v358 = vld [vmem:[%s116 + $0x748] sm:$0xff]
      %v359 = vld [vmem:[%s116 + $0x750] sm:$0xff]
      %v360 = vld [vmem:[%s116 + $0x758] sm:$0xff]
      %v361 = vld [vmem:[%s116 + $0x760] sm:$0xff]
      %v362 = vld [vmem:[%s116 + $0x768] sm:$0xff]
      %v363 = vld [vmem:[%s116 + $0x770] sm:$0xff]
      %v364 = vld [vmem:[%s116 + $0x778] sm:$0xff]
      %v365 = vld [vmem:[%s116 + $0x780] sm:$0xff]
      %v366 = vld [vmem:[%s116 + $0x788] sm:$0xff]
      %v367 = vld [vmem:[%s116 + $0x790] sm:$0xff]
      %v368 = vld [vmem:[%s116 + $0x798] sm:$0xff]
      %v369 = vld [vmem:[%s116 + $0x7a0] sm:$0xff]
      %v370 = vld [vmem:[%s116 + $0x7a8] sm:$0xff]
      %v371 = vld [vmem:[%s116 + $0x7b0] sm:$0xff]
      %v372 = vld [vmem:[%s116 + $0x7b8] sm:$0xff]
      %v373 = vld [vmem:[%s116 + $0x7c0] sm:$0xff]
      %v374 = vld [vmem:[%s116 + $0x7c8] sm:$0xff]
      %v375 = vld [vmem:[%s116 + $0x7d0] sm:$0xff]
      %v376 = vld [vmem:[%s116 + $0x7d8] sm:$0xff]
      %v377 = vld [vmem:[%s116 + $0x7e0] sm:$0xff]
      %v378 = vld [vmem:[%s116 + $0x7e8] sm:$0xff]
      %v379 = vld [vmem:[%s116 + $0x7f0] sm:$0xff]
      %v380 = vld [vmem:[%s116 + $0x7f8] sm:$0xff]
      %v381 = vsub.f32 1.0, %v125
      %v382 = vsub.f32 1.0, %v126
      %v383 = vsub.f32 1.0, %v127
      %v384 = vsub.f32 1.0, %v128
      %v385 = vsub.f32 1.0, %v129
      %v386 = vsub.f32 1.0, %v130
      %v387 = vsub.f32 1.0, %v131
      %v388 = vsub.f32 1.0, %v132
      %v389 = vsub.f32 1.0, %v133
      %v390 = vsub.f32 1.0, %v134
      %v391 = vsub.f32 1.0, %v135
      %v392 = vsub.f32 1.0, %v136
      %v393 = vsub.f32 1.0, %v137
      %v394 = vsub.f32 1.0, %v138
      %v395 = vsub.f32 1.0, %v139
      %v396 = vsub.f32 1.0, %v140
      %v397 = vsub.f32 1.0, %v141
      %v398 = vsub.f32 1.0, %v142
      %v399 = vsub.f32 1.0, %v143
      %v400 = vsub.f32 1.0, %v144
      %v401 = vsub.f32 1.0, %v145
      %v402 = vsub.f32 1.0, %v146
      %v403 = vsub.f32 1.0, %v147
      %v404 = vsub.f32 1.0, %v148
      %v405 = vsub.f32 1.0, %v149
      %v406 = vsub.f32 1.0, %v150
      %v407 = vsub.f32 1.0, %v151
      %v408 = vsub.f32 1.0, %v152
      %v409 = vsub.f32 1.0, %v153
      %v410 = vsub.f32 1.0, %v154
      %v411 = vsub.f32 1.0, %v155
      %v412 = vsub.f32 1.0, %v156
      %v413 = vsub.f32 1.0, %v157
      %v414 = vsub.f32 1.0, %v158
      %v415 = vsub.f32 1.0, %v159
      %v416 = vsub.f32 1.0, %v160
      %v417 = vsub.f32 1.0, %v161
      %v418 = vsub.f32 1.0, %v162
      %v419 = vsub.f32 1.0, %v163
      %v420 = vsub.f32 1.0, %v164
      %v421 = vsub.f32 1.0, %v165
      %v422 = vsub.f32 1.0, %v166
      %v423 = vsub.f32 1.0, %v167
      %v424 = vsub.f32 1.0, %v168
      %v425 = vsub.f32 1.0, %v169
      %v426 = vsub.f32 1.0, %v170
      %v427 = vsub.f32 1.0, %v171
      %v428 = vsub.f32 1.0, %v172
      %v429 = vsub.f32 1.0, %v173
      %v430 = vsub.f32 1.0, %v174
      %v431 = vsub.f32 1.0, %v175
      %v432 = vsub.f32 1.0, %v176
      %v433 = vsub.f32 1.0, %v177
      %v434 = vsub.f32 1.0, %v178
      %v435 = vsub.f32 1.0, %v179
      %v436 = vsub.f32 1.0, %v180
      %v437 = vsub.f32 1.0, %v181
      %v438 = vsub.f32 1.0, %v182
      %v439 = vsub.f32 1.0, %v183
      %v440 = vsub.f32 1.0, %v184
      %v441 = vsub.f32 1.0, %v185
      %v442 = vsub.f32 1.0, %v186
      %v443 = vsub.f32 1.0, %v187
      %v444 = vsub.f32 1.0, %v188
      %v445 = vsub.f32 1.0, %v189
      %v446 = vsub.f32 1.0, %v190
      %v447 = vsub.f32 1.0, %v191
      %v448 = vsub.f32 1.0, %v192
      %v449 = vsub.f32 1.0, %v193
      %v450 = vsub.f32 1.0, %v194
      %v451 = vsub.f32 1.0, %v195
      %v452 = vsub.f32 1.0, %v196
      %v453 = vsub.f32 1.0, %v197
      %v454 = vsub.f32 1.0, %v198
      %v455 = vsub.f32 1.0, %v199
      %v456 = vsub.f32 1.0, %v200
      %v457 = vsub.f32 1.0, %v201
      %v458 = vsub.f32 1.0, %v202
      %v459 = vsub.f32 1.0, %v203
      %v460 = vsub.f32 1.0, %v204
      %v461 = vsub.f32 1.0, %v205
      %v462 = vsub.f32 1.0, %v206
      %v463 = vsub.f32 1.0, %v207
      %v464 = vsub.f32 1.0, %v208
      %v465 = vsub.f32 1.0, %v209
      %v466 = vsub.f32 1.0, %v210
      %v467 = vsub.f32 1.0, %v211
      %v468 = vsub.f32 1.0, %v212
      %v469 = vsub.f32 1.0, %v213
      %v470 = vsub.f32 1.0, %v214
      %v471 = vsub.f32 1.0, %v215
      %v472 = vsub.f32 1.0, %v216
      %v473 = vsub.f32 1.0, %v217
      %v474 = vsub.f32 1.0, %v218
      %v475 = vsub.f32 1.0, %v219
      %v476 = vsub.f32 1.0, %v220
      %v477 = vsub.f32 1.0, %v221
      %v478 = vsub.f32 1.0, %v222
      %v479 = vsub.f32 1.0, %v223
      %v480 = vsub.f32 1.0, %v224
      %v481 = vsub.f32 1.0, %v225
      %v482 = vsub.f32 1.0, %v226
      %v483 = vsub.f32 1.0, %v227
      %v484 = vsub.f32 1.0, %v228
      %v485 = vsub.f32 1.0, %v229
      %v486 = vsub.f32 1.0, %v230
      %v487 = vsub.f32 1.0, %v231
      %v488 = vsub.f32 1.0, %v232
      %v489 = vsub.f32 1.0, %v233
      %v490 = vsub.f32 1.0, %v234
      %v491 = vsub.f32 1.0, %v235
      %v492 = vsub.f32 1.0, %v236
      %v493 = vsub.f32 1.0, %v237
      %v494 = vsub.f32 1.0, %v238
      %v495 = vsub.f32 1.0, %v239
      %v496 = vsub.f32 1.0, %v240
      %v497 = vsub.f32 1.0, %v241
      %v498 = vsub.f32 1.0, %v242
      %v499 = vsub.f32 1.0, %v243
      %v500 = vsub.f32 1.0, %v244
      %v501 = vsub.f32 1.0, %v245
      %v502 = vsub.f32 1.0, %v246
      %v503 = vsub.f32 1.0, %v247
      %v504 = vsub.f32 1.0, %v248
      %v505 = vsub.f32 1.0, %v249
      %v506 = vsub.f32 1.0, %v250
      %v507 = vsub.f32 1.0, %v251
      %v508 = vsub.f32 1.0, %v252
      %v509 = vsub.f32 1.0, %v253
      %v510 = vsub.f32 1.0, %v254
      %v511 = vsub.f32 1.0, %v255
      %v512 = vsub.f32 1.0, %v256
      %v513 = vsub.f32 1.0, %v257
      %v514 = vsub.f32 1.0, %v258
      %v515 = vsub.f32 1.0, %v259
      %v516 = vsub.f32 1.0, %v260
      %v517 = vsub.f32 1.0, %v261
      %v518 = vsub.f32 1.0, %v262
      %v519 = vsub.f32 1.0, %v263
      %v520 = vsub.f32 1.0, %v264
      %v521 = vsub.f32 1.0, %v265
      %v522 = vsub.f32 1.0, %v266
      %v523 = vsub.f32 1.0, %v267
      %v524 = vsub.f32 1.0, %v268
      %v525 = vsub.f32 1.0, %v269
      %v526 = vsub.f32 1.0, %v270
      %v527 = vsub.f32 1.0, %v271
      %v528 = vsub.f32 1.0, %v272
      %v529 = vsub.f32 1.0, %v273
      %v530 = vsub.f32 1.0, %v274
      %v531 = vsub.f32 1.0, %v275
      %v532 = vsub.f32 1.0, %v276
      %v533 = vsub.f32 1.0, %v277
      %v534 = vsub.f32 1.0, %v278
      %v535 = vsub.f32 1.0, %v279
      %v536 = vsub.f32 1.0, %v280
      %v537 = vsub.f32 1.0, %v281
      %v538 = vsub.f32 1.0, %v282
      %v539 = vsub.f32 1.0, %v283
      %v540 = vsub.f32 1.0, %v284
      %v541 = vsub.f32 1.0, %v285
      %v542 = vsub.f32 1.0, %v286
      %v543 = vsub.f32 1.0, %v287
      %v544 = vsub.f32 1.0, %v288
      %v545 = vsub.f32 1.0, %v289
      %v546 = vsub.f32 1.0, %v290
      %v547 = vsub.f32 1.0, %v291
      %v548 = vsub.f32 1.0, %v292
      %v549 = vsub.f32 1.0, %v293
      %v550 = vsub.f32 1.0, %v294
      %v551 = vsub.f32 1.0, %v295
      %v552 = vsub.f32 1.0, %v296
      %v553 = vsub.f32 1.0, %v297
      %v554 = vsub.f32 1.0, %v298
      %v555 = vsub.f32 1.0, %v299
      %v556 = vsub.f32 1.0, %v300
      %v557 = vsub.f32 1.0, %v301
      %v558 = vsub.f32 1.0, %v302
      %v559 = vsub.f32 1.0, %v303
      %v560 = vsub.f32 1.0, %v304
      %v561 = vsub.f32 1.0, %v305
      %v562 = vsub.f32 1.0, %v306
      %v563 = vsub.f32 1.0, %v307
      %v564 = vsub.f32 1.0, %v308
      %v565 = vsub.f32 1.0, %v309
      %v566 = vsub.f32 1.0, %v310
      %v567 = vsub.f32 1.0, %v311
      %v568 = vsub.f32 1.0, %v312
      %v569 = vsub.f32 1.0, %v313
      %v570 = vsub.f32 1.0, %v314
      %v571 = vsub.f32 1.0, %v315
      %v572 = vsub.f32 1.0, %v316
      %v573 = vsub.f32 1.0, %v317
      %v574 = vsub.f32 1.0, %v318
      %v575 = vsub.f32 1.0, %v319
      %v576 = vsub.f32 1.0, %v320
      %v577 = vsub.f32 1.0, %v321
      %v578 = vsub.f32 1.0, %v322
      %v579 = vsub.f32 1.0, %v323
      %v580 = vsub.f32 1.0, %v324
      %v581 = vsub.f32 1.0, %v325
      %v582 = vsub.f32 1.0, %v326
      %v583 = vsub.f32 1.0, %v327
      %v584 = vsub.f32 1.0, %v328
      %v585 = vsub.f32 1.0, %v329
      %v586 = vsub.f32 1.0, %v330
      %v587 = vsub.f32 1.0, %v331
      %v588 = vsub.f32 1.0, %v332
      %v589 = vsub.f32 1.0, %v333
      %v590 = vsub.f32 1.0, %v334
      %v591 = vsub.f32 1.0, %v335
      %v592 = vsub.f32 1.0, %v336
      %v593 = vsub.f32 1.0, %v337
      %v594 = vsub.f32 1.0, %v338
      %v595 = vsub.f32 1.0, %v339
      %v596 = vsub.f32 1.0, %v340
      %v597 = vsub.f32 1.0, %v341
      %v598 = vsub.f32 1.0, %v342
      %v599 = vsub.f32 1.0, %v343
      %v600 = vsub.f32 1.0, %v344
      %v601 = vsub.f32 1.0, %v345
      %v602 = vsub.f32 1.0, %v346
      %v603 = vsub.f32 1.0, %v347
      %v604 = vsub.f32 1.0, %v348
      %v605 = vsub.f32 1.0, %v349
      %v606 = vsub.f32 1.0, %v350
      %v607 = vsub.f32 1.0, %v351
      %v608 = vsub.f32 1.0, %v352
      %v609 = vsub.f32 1.0, %v353
      %v610 = vsub.f32 1.0, %v354
      %v611 = vsub.f32 1.0, %v355
      %v612 = vsub.f32 1.0, %v356
      %v613 = vsub.f32 1.0, %v357
      %v614 = vsub.f32 1.0, %v358
      %v615 = vsub.f32 1.0, %v359
      %v616 = vsub.f32 1.0, %v360
      %v617 = vsub.f32 1.0, %v361
      %v618 = vsub.f32 1.0, %v362
      %v619 = vsub.f32 1.0, %v363
      %v620 = vsub.f32 1.0, %v364
      %v621 = vsub.f32 1.0, %v365
      %v622 = vsub.f32 1.0, %v366
      %v623 = vsub.f32 1.0, %v367
      %v624 = vsub.f32 1.0, %v368
      %v625 = vsub.f32 1.0, %v369
      %v626 = vsub.f32 1.0, %v370
      %v627 = vsub.f32 1.0, %v371
      %v628 = vsub.f32 1.0, %v372
      %v629 = vsub.f32 1.0, %v373
      %v630 = vsub.f32 1.0, %v374
      %v631 = vsub.f32 1.0, %v375
      %v632 = vsub.f32 1.0, %v376
      %v633 = vsub.f32 1.0, %v377
      %v634 = vsub.f32 1.0, %v378
      %v635 = vsub.f32 1.0, %v379
      %v636 = vsub.f32 1.0, %v380
      %637 = vst [vmem:[%s123] sm:$0xff] %v381
      %638 = vst [vmem:[%s123 + $0x8] sm:$0xff] %v382
      %639 = vst [vmem:[%s123 + $0x10] sm:$0xff] %v383
      %640 = vst [vmem:[%s123 + $0x18] sm:$0xff] %v384
      %641 = vst [vmem:[%s123 + $0x20] sm:$0xff] %v385
      %642 = vst [vmem:[%s123 + $0x28] sm:$0xff] %v386
      %643 = vst [vmem:[%s123 + $0x30] sm:$0xff] %v387
      %644 = vst [vmem:[%s123 + $0x38] sm:$0xff] %v388
      %645 = vst [vmem:[%s123 + $0x40] sm:$0xff] %v389
      %646 = vst [vmem:[%s123 + $0x48] sm:$0xff] %v390
      %647 = vst [vmem:[%s123 + $0x50] sm:$0xff] %v391
      %648 = vst [vmem:[%s123 + $0x58] sm:$0xff] %v392
      %649 = vst [vmem:[%s123 + $0x60] sm:$0xff] %v393
      %650 = vst [vmem:[%s123 + $0x68] sm:$0xff] %v394
      %651 = vst [vmem:[%s123 + $0x70] sm:$0xff] %v395
      %652 = vst [vmem:[%s123 + $0x78] sm:$0xff] %v396
      %653 = vst [vmem:[%s123 + $0x80] sm:$0xff] %v397
      %654 = vst [vmem:[%s123 + $0x88] sm:$0xff] %v398
      %655 = vst [vmem:[%s123 + $0x90] sm:$0xff] %v399
      %656 = vst [vmem:[%s123 + $0x98] sm:$0xff] %v400
      %657 = vst [vmem:[%s123 + $0xa0] sm:$0xff] %v401
      %658 = vst [vmem:[%s123 + $0xa8] sm:$0xff] %v402
      %659 = vst [vmem:[%s123 + $0xb0] sm:$0xff] %v403
      %660 = vst [vmem:[%s123 + $0xb8] sm:$0xff] %v404
      %661 = vst [vmem:[%s123 + $0xc0] sm:$0xff] %v405
      %662 = vst [vmem:[%s123 + $0xc8] sm:$0xff] %v406
      %663 = vst [vmem:[%s123 + $0xd0] sm:$0xff] %v407
      %664 = vst [vmem:[%s123 + $0xd8] sm:$0xff] %v408
      %665 = vst [vmem:[%s123 + $0xe0] sm:$0xff] %v409
      %666 = vst [vmem:[%s123 + $0xe8] sm:$0xff] %v410
      %667 = vst [vmem:[%s123 + $0xf0] sm:$0xff] %v411
      %668 = vst [vmem:[%s123 + $0xf8] sm:$0xff] %v412
      %669 = vst [vmem:[%s123 + $0x100] sm:$0xff] %v413
      %670 = vst [vmem:[%s123 + $0x108] sm:$0xff] %v414
      %671 = vst [vmem:[%s123 + $0x110] sm:$0xff] %v415
      %672 = vst [vmem:[%s123 + $0x118] sm:$0xff] %v416
      %673 = vst [vmem:[%s123 + $0x120] sm:$0xff] %v417
      %674 = vst [vmem:[%s123 + $0x128] sm:$0xff] %v418
      %675 = vst [vmem:[%s123 + $0x130] sm:$0xff] %v419
      %676 = vst [vmem:[%s123 + $0x138] sm:$0xff] %v420
      %677 = vst [vmem:[%s123 + $0x140] sm:$0xff] %v421
      %678 = vst [vmem:[%s123 + $0x148] sm:$0xff] %v422
      %679 = vst [vmem:[%s123 + $0x150] sm:$0xff] %v423
      %680 = vst [vmem:[%s123 + $0x158] sm:$0xff] %v424
      %681 = vst [vmem:[%s123 + $0x160] sm:$0xff] %v425
      %682 = vst [vmem:[%s123 + $0x168] sm:$0xff] %v426
      %683 = vst [vmem:[%s123 + $0x170] sm:$0xff] %v427
      %684 = vst [vmem:[%s123 + $0x178] sm:$0xff] %v428
      %685 = vst [vmem:[%s123 + $0x180] sm:$0xff] %v429
      %686 = vst [vmem:[%s123 + $0x188] sm:$0xff] %v430
      %687 = vst [vmem:[%s123 + $0x190] sm:$0xff] %v431
      %688 = vst [vmem:[%s123 + $0x198] sm:$0xff] %v432
      %689 = vst [vmem:[%s123 + $0x1a0] sm:$0xff] %v433
      %690 = vst [vmem:[%s123 + $0x1a8] sm:$0xff] %v434
      %691 = vst [vmem:[%s123 + $0x1b0] sm:$0xff] %v435
      %692 = vst [vmem:[%s123 + $0x1b8] sm:$0xff] %v436
      %693 = vst [vmem:[%s123 + $0x1c0] sm:$0xff] %v437
      %694 = vst [vmem:[%s123 + $0x1c8] sm:$0xff] %v438
      %695 = vst [vmem:[%s123 + $0x1d0] sm:$0xff] %v439
      %696 = vst [vmem:[%s123 + $0x1d8] sm:$0xff] %v440
      %697 = vst [vmem:[%s123 + $0x1e0] sm:$0xff] %v441
      %698 = vst [vmem:[%s123 + $0x1e8] sm:$0xff] %v442
      %699 = vst [vmem:[%s123 + $0x1f0] sm:$0xff] %v443
      %700 = vst [vmem:[%s123 + $0x1f8] sm:$0xff] %v444
      %701 = vst [vmem:[%s123 + $0x200] sm:$0xff] %v445
      %702 = vst [vmem:[%s123 + $0x208] sm:$0xff] %v446
      %703 = vst [vmem:[%s123 + $0x210] sm:$0xff] %v447
      %704 = vst [vmem:[%s123 + $0x218] sm:$0xff] %v448
      %705 = vst [vmem:[%s123 + $0x220] sm:$0xff] %v449
      %706 = vst [vmem:[%s123 + $0x228] sm:$0xff] %v450
      %707 = vst [vmem:[%s123 + $0x230] sm:$0xff] %v451
      %708 = vst [vmem:[%s123 + $0x238] sm:$0xff] %v452
      %709 = vst [vmem:[%s123 + $0x240] sm:$0xff] %v453
      %710 = vst [vmem:[%s123 + $0x248] sm:$0xff] %v454
      %711 = vst [vmem:[%s123 + $0x250] sm:$0xff] %v455
      %712 = vst [vmem:[%s123 + $0x258] sm:$0xff] %v456
      %713 = vst [vmem:[%s123 + $0x260] sm:$0xff] %v457
      %714 = vst [vmem:[%s123 + $0x268] sm:$0xff] %v458
      %715 = vst [vmem:[%s123 + $0x270] sm:$0xff] %v459
      %716 = vst [vmem:[%s123 + $0x278] sm:$0xff] %v460
      %717 = vst [vmem:[%s123 + $0x280] sm:$0xff] %v461
      %718 = vst [vmem:[%s123 + $0x288] sm:$0xff] %v462
      %719 = vst [vmem:[%s123 + $0x290] sm:$0xff] %v463
      %720 = vst [vmem:[%s123 + $0x298] sm:$0xff] %v464
      %721 = vst [vmem:[%s123 + $0x2a0] sm:$0xff] %v465
      %722 = vst [vmem:[%s123 + $0x2a8] sm:$0xff] %v466
      %723 = vst [vmem:[%s123 + $0x2b0] sm:$0xff] %v467
      %724 = vst [vmem:[%s123 + $0x2b8] sm:$0xff] %v468
      %725 = vst [vmem:[%s123 + $0x2c0] sm:$0xff] %v469
      %726 = vst [vmem:[%s123 + $0x2c8] sm:$0xff] %v470
      %727 = vst [vmem:[%s123 + $0x2d0] sm:$0xff] %v471
      %728 = vst [vmem:[%s123 + $0x2d8] sm:$0xff] %v472
      %729 = vst [vmem:[%s123 + $0x2e0] sm:$0xff] %v473
      %730 = vst [vmem:[%s123 + $0x2e8] sm:$0xff] %v474
      %731 = vst [vmem:[%s123 + $0x2f0] sm:$0xff] %v475
      %732 = vst [vmem:[%s123 + $0x2f8] sm:$0xff] %v476
      %733 = vst [vmem:[%s123 + $0x300] sm:$0xff] %v477
      %734 = vst [vmem:[%s123 + $0x308] sm:$0xff] %v478
      %735 = vst [vmem:[%s123 + $0x310] sm:$0xff] %v479
      %736 = vst [vmem:[%s123 + $0x318] sm:$0xff] %v480
      %737 = vst [vmem:[%s123 + $0x320] sm:$0xff] %v481
      %738 = vst [vmem:[%s123 + $0x328] sm:$0xff] %v482
      %739 = vst [vmem:[%s123 + $0x330] sm:$0xff] %v483
      %740 = vst [vmem:[%s123 + $0x338] sm:$0xff] %v484
      %741 = vst [vmem:[%s123 + $0x340] sm:$0xff] %v485
      %742 = vst [vmem:[%s123 + $0x348] sm:$0xff] %v486
      %743 = vst [vmem:[%s123 + $0x350] sm:$0xff] %v487
      %744 = vst [vmem:[%s123 + $0x358] sm:$0xff] %v488
      %745 = vst [vmem:[%s123 + $0x360] sm:$0xff] %v489
      %746 = vst [vmem:[%s123 + $0x368] sm:$0xff] %v490
      %747 = vst [vmem:[%s123 + $0x370] sm:$0xff] %v491
      %748 = vst [vmem:[%s123 + $0x378] sm:$0xff] %v492
      %749 = vst [vmem:[%s123 + $0x380] sm:$0xff] %v493
      %750 = vst [vmem:[%s123 + $0x388] sm:$0xff] %v494
      %751 = vst [vmem:[%s123 + $0x390] sm:$0xff] %v495
      %752 = vst [vmem:[%s123 + $0x398] sm:$0xff] %v496
      %753 = vst [vmem:[%s123 + $0x3a0] sm:$0xff] %v497
      %754 = vst [vmem:[%s123 + $0x3a8] sm:$0xff] %v498
      %755 = vst [vmem:[%s123 + $0x3b0] sm:$0xff] %v499
      %756 = vst [vmem:[%s123 + $0x3b8] sm:$0xff] %v500
      %757 = vst [vmem:[%s123 + $0x3c0] sm:$0xff] %v501
      %758 = vst [vmem:[%s123 + $0x3c8] sm:$0xff] %v502
      %759 = vst [vmem:[%s123 + $0x3d0] sm:$0xff] %v503
      %760 = vst [vmem:[%s123 + $0x3d8] sm:$0xff] %v504
      %761 = vst [vmem:[%s123 + $0x3e0] sm:$0xff] %v505
      %762 = vst [vmem:[%s123 + $0x3e8] sm:$0xff] %v506
      %763 = vst [vmem:[%s123 + $0x3f0] sm:$0xff] %v507
      %764 = vst [vmem:[%s123 + $0x3f8] sm:$0xff] %v508
      %765 = vst [vmem:[%s123 + $0x400] sm:$0xff] %v509
      %766 = vst [vmem:[%s123 + $0x408] sm:$0xff] %v510
      %767 = vst [vmem:[%s123 + $0x410] sm:$0xff] %v511
      %768 = vst [vmem:[%s123 + $0x418] sm:$0xff] %v512
      %769 = vst [vmem:[%s123 + $0x420] sm:$0xff] %v513
      %770 = vst [vmem:[%s123 + $0x428] sm:$0xff] %v514
      %771 = vst [vmem:[%s123 + $0x430] sm:$0xff] %v515
      %772 = vst [vmem:[%s123 + $0x438] sm:$0xff] %v516
      %773 = vst [vmem:[%s123 + $0x440] sm:$0xff] %v517
      %774 = vst [vmem:[%s123 + $0x448] sm:$0xff] %v518
      %775 = vst [vmem:[%s123 + $0x450] sm:$0xff] %v519
      %776 = vst [vmem:[%s123 + $0x458] sm:$0xff] %v520
      %777 = vst [vmem:[%s123 + $0x460] sm:$0xff] %v521
      %778 = vst [vmem:[%s123 + $0x468] sm:$0xff] %v522
      %779 = vst [vmem:[%s123 + $0x470] sm:$0xff] %v523
      %780 = vst [vmem:[%s123 + $0x478] sm:$0xff] %v524
      %781 = vst [vmem:[%s123 + $0x480] sm:$0xff] %v525
      %782 = vst [vmem:[%s123 + $0x488] sm:$0xff] %v526
      %783 = vst [vmem:[%s123 + $0x490] sm:$0xff] %v527
      %784 = vst [vmem:[%s123 + $0x498] sm:$0xff] %v528
      %785 = vst [vmem:[%s123 + $0x4a0] sm:$0xff] %v529
      %786 = vst [vmem:[%s123 + $0x4a8] sm:$0xff] %v530
      %787 = vst [vmem:[%s123 + $0x4b0] sm:$0xff] %v531
      %788 = vst [vmem:[%s123 + $0x4b8] sm:$0xff] %v532
      %789 = vst [vmem:[%s123 + $0x4c0] sm:$0xff] %v533
      %790 = vst [vmem:[%s123 + $0x4c8] sm:$0xff] %v534
      %791 = vst [vmem:[%s123 + $0x4d0] sm:$0xff] %v535
      %792 = vst [vmem:[%s123 + $0x4d8] sm:$0xff] %v536
      %793 = vst [vmem:[%s123 + $0x4e0] sm:$0xff] %v537
      %794 = vst [vmem:[%s123 + $0x4e8] sm:$0xff] %v538
      %795 = vst [vmem:[%s123 + $0x4f0] sm:$0xff] %v539
      %796 = vst [vmem:[%s123 + $0x4f8] sm:$0xff] %v540
      %797 = vst [vmem:[%s123 + $0x500] sm:$0xff] %v541
      %798 = vst [vmem:[%s123 + $0x508] sm:$0xff] %v542
      %799 = vst [vmem:[%s123 + $0x510] sm:$0xff] %v543
      %800 = vst [vmem:[%s123 + $0x518] sm:$0xff] %v544
      %801 = vst [vmem:[%s123 + $0x520] sm:$0xff] %v545
      %802 = vst [vmem:[%s123 + $0x528] sm:$0xff] %v546
      %803 = vst [vmem:[%s123 + $0x530] sm:$0xff] %v547
      %804 = vst [vmem:[%s123 + $0x538] sm:$0xff] %v548
      %805 = vst [vmem:[%s123 + $0x540] sm:$0xff] %v549
      %806 = vst [vmem:[%s123 + $0x548] sm:$0xff] %v550
      %807 = vst [vmem:[%s123 + $0x550] sm:$0xff] %v551
      %808 = vst [vmem:[%s123 + $0x558] sm:$0xff] %v552
      %809 = vst [vmem:[%s123 + $0x560] sm:$0xff] %v553
      %810 = vst [vmem:[%s123 + $0x568] sm:$0xff] %v554
      %811 = vst [vmem:[%s123 + $0x570] sm:$0xff] %v555
      %812 = vst [vmem:[%s123 + $0x578] sm:$0xff] %v556
      %813 = vst [vmem:[%s123 + $0x580] sm:$0xff] %v557
      %814 = vst [vmem:[%s123 + $0x588] sm:$0xff] %v558
      %815 = vst [vmem:[%s123 + $0x590] sm:$0xff] %v559
      %816 = vst [vmem:[%s123 + $0x598] sm:$0xff] %v560
      %817 = vst [vmem:[%s123 + $0x5a0] sm:$0xff] %v561
      %818 = vst [vmem:[%s123 + $0x5a8] sm:$0xff] %v562
      %819 = vst [vmem:[%s123 + $0x5b0] sm:$0xff] %v563
      %820 = vst [vmem:[%s123 + $0x5b8] sm:$0xff] %v564
      %821 = vst [vmem:[%s123 + $0x5c0] sm:$0xff] %v565
      %822 = vst [vmem:[%s123 + $0x5c8] sm:$0xff] %v566
      %823 = vst [vmem:[%s123 + $0x5d0] sm:$0xff] %v567
      %824 = vst [vmem:[%s123 + $0x5d8] sm:$0xff] %v568
      %825 = vst [vmem:[%s123 + $0x5e0] sm:$0xff] %v569
      %826 = vst [vmem:[%s123 + $0x5e8] sm:$0xff] %v570
      %827 = vst [vmem:[%s123 + $0x5f0] sm:$0xff] %v571
      %828 = vst [vmem:[%s123 + $0x5f8] sm:$0xff] %v572
      %829 = vst [vmem:[%s123 + $0x600] sm:$0xff] %v573
      %830 = vst [vmem:[%s123 + $0x608] sm:$0xff] %v574
      %831 = vst [vmem:[%s123 + $0x610] sm:$0xff] %v575
      %832 = vst [vmem:[%s123 + $0x618] sm:$0xff] %v576
      %833 = vst [vmem:[%s123 + $0x620] sm:$0xff] %v577
      %834 = vst [vmem:[%s123 + $0x628] sm:$0xff] %v578
      %835 = vst [vmem:[%s123 + $0x630] sm:$0xff] %v579
      %836 = vst [vmem:[%s123 + $0x638] sm:$0xff] %v580
      %837 = vst [vmem:[%s123 + $0x640] sm:$0xff] %v581
      %838 = vst [vmem:[%s123 + $0x648] sm:$0xff] %v582
      %839 = vst [vmem:[%s123 + $0x650] sm:$0xff] %v583
      %840 = vst [vmem:[%s123 + $0x658] sm:$0xff] %v584
      %841 = vst [vmem:[%s123 + $0x660] sm:$0xff] %v585
      %842 = vst [vmem:[%s123 + $0x668] sm:$0xff] %v586
      %843 = vst [vmem:[%s123 + $0x670] sm:$0xff] %v587
      %844 = vst [vmem:[%s123 + $0x678] sm:$0xff] %v588
      %845 = vst [vmem:[%s123 + $0x680] sm:$0xff] %v589
      %846 = vst [vmem:[%s123 + $0x688] sm:$0xff] %v590
      %847 = vst [vmem:[%s123 + $0x690] sm:$0xff] %v591
      %848 = vst [vmem:[%s123 + $0x698] sm:$0xff] %v592
      %849 = vst [vmem:[%s123 + $0x6a0] sm:$0xff] %v593
      %850 = vst [vmem:[%s123 + $0x6a8] sm:$0xff] %v594
      %851 = vst [vmem:[%s123 + $0x6b0] sm:$0xff] %v595
      %852 = vst [vmem:[%s123 + $0x6b8] sm:$0xff] %v596
      %853 = vst [vmem:[%s123 + $0x6c0] sm:$0xff] %v597
      %854 = vst [vmem:[%s123 + $0x6c8] sm:$0xff] %v598
      %855 = vst [vmem:[%s123 + $0x6d0] sm:$0xff] %v599
      %856 = vst [vmem:[%s123 + $0x6d8] sm:$0xff] %v600
      %857 = vst [vmem:[%s123 + $0x6e0] sm:$0xff] %v601
      %858 = vst [vmem:[%s123 + $0x6e8] sm:$0xff] %v602
      %859 = vst [vmem:[%s123 + $0x6f0] sm:$0xff] %v603
      %860 = vst [vmem:[%s123 + $0x6f8] sm:$0xff] %v604
      %861 = vst [vmem:[%s123 + $0x700] sm:$0xff] %v605
      %862 = vst [vmem:[%s123 + $0x708] sm:$0xff] %v606
      %863 = vst [vmem:[%s123 + $0x710] sm:$0xff] %v607
      %864 = vst [vmem:[%s123 + $0x718] sm:$0xff] %v608
      %865 = vst [vmem:[%s123 + $0x720] sm:$0xff] %v609
      %866 = vst [vmem:[%s123 + $0x728] sm:$0xff] %v610
      %867 = vst [vmem:[%s123 + $0x730] sm:$0xff] %v611
      %868 = vst [vmem:[%s123 + $0x738] sm:$0xff] %v612
      %869 = vst [vmem:[%s123 + $0x740] sm:$0xff] %v613
      %870 = vst [vmem:[%s123 + $0x748] sm:$0xff] %v614
      %871 = vst [vmem:[%s123 + $0x750] sm:$0xff] %v615
      %872 = vst [vmem:[%s123 + $0x758] sm:$0xff] %v616
      %873 = vst [vmem:[%s123 + $0x760] sm:$0xff] %v617
      %874 = vst [vmem:[%s123 + $0x768] sm:$0xff] %v618
      %875 = vst [vmem:[%s123 + $0x770] sm:$0xff] %v619
      %876 = vst [vmem:[%s123 + $0x778] sm:$0xff] %v620
      %877 = vst [vmem:[%s123 + $0x780] sm:$0xff] %v621
      %878 = vst [vmem:[%s123 + $0x788] sm:$0xff] %v622
      %879 = vst [vmem:[%s123 + $0x790] sm:$0xff] %v623
      %880 = vst [vmem:[%s123 + $0x798] sm:$0xff] %v624
      %881 = vst [vmem:[%s123 + $0x7a0] sm:$0xff] %v625
      %882 = vst [vmem:[%s123 + $0x7a8] sm:$0xff] %v626
      %883 = vst [vmem:[%s123 + $0x7b0] sm:$0xff] %v627
      %884 = vst [vmem:[%s123 + $0x7b8] sm:$0xff] %v628
      %885 = vst [vmem:[%s123 + $0x7c0] sm:$0xff] %v629
      %886 = vst [vmem:[%s123 + $0x7c8] sm:$0xff] %v630
      %887 = vst [vmem:[%s123 + $0x7d0] sm:$0xff] %v631
      %888 = vst [vmem:[%s123 + $0x7d8] sm:$0xff] %v632
      %889 = vst [vmem:[%s123 + $0x7e0] sm:$0xff] %v633
      %890 = vst [vmem:[%s123 + $0x7e8] sm:$0xff] %v634
      %891 = vst [vmem:[%s123 + $0x7f0] sm:$0xff] %v635
      %892 = vst [vmem:[%s123 + $0x7f8] sm:$0xff] %v636
      %s893 = smul.u32 8, %s12
      %p894 = scmp.lt.s32.totalorder %s893, 15
      %s895 = scalar_select %p894, %s893, 15
      %s896 = smul.addr %s895, 32
      %s897 = smul.addr %s896, 8
      %s898 = scalar_lea.vmem %s1, %s897
      // Predicated region
      $region25: #{_invert_impl.1} parent=23 // pred_check
        %p899 = pneg %p56
      $region26: #{_invert_impl.1} parent=23 // pred_check_branch
        %901 = sbr.rel (%p899) target = $region28
      $region27: #{_invert_impl.1} parent=23 // pred_region
        %s902 = smul.u32 8, %s12
      $region28: #{_invert_impl.1} parent=23 // pred_fallthru
        _
    $region24: #{_invert_impl.1} parent=5 // pred_fallthru
      _
    %p903 = scmp.le.s32.totalorder 2, %s7
    // Predicated region
    $region29: #{_invert_impl.1} parent=5 // pred_check
      %p904 = pneg %p903
    $region30: #{_invert_impl.1} parent=5 // pred_check_branch
      %906 = sbr.rel (%p904) target = $region32
    $region31: #{_invert_impl.1} parent=5 // pred_region
      %s907 = ssub.s32 %s7, 2
      // Predicated region
      $region33: #{_invert_impl.1} parent=31 // pred_check
        %p908 = pneg %p62
      $region34: #{_invert_impl.1} parent=31 // pred_check_branch
        %910 = sbr.rel (%p908) target = $region36
      $region35: #{_invert_impl.1} parent=31 // pred_region
        %s911 = smul.u32 8, %s13
        %p912 = scmp.lt.s32.totalorder %s911, 15
        %s913 = scalar_select %p912, %s911, 15
        %s914 = smul.addr %s913, 32
        %s915 = smul.addr %s914, 8
        %s916 = scalar_lea.vmem %s1, %s915
      $region36: #{_invert_impl.1} parent=31 // pred_fallthru
        _
    $region32: #{_invert_impl.1} parent=5 // pred_fallthru
      _
  $region6: #{_invert_impl.1} parent=0 // loop_footer
    %s11 = sadd.s32 1, %s7
  $region7: #{_invert_impl.1} parent=0 // loop_footer_branch
    %6 = sbr.rel target = $region3
  $region8: #{_invert_impl.1} parent=0 // loop_exit
    _

</llo_original>
